<compile_context>
chip_gen: v5e
topology: v5e:2x2
jax: 0.10.0
libtpu: 0.0.40
codegen_flags: <defaults>
</compile_context>

<pallas_src>
import functools

import jax
import jax.numpy as jnp
from jax.experimental import pallas as pl
from jax.experimental.pallas import tpu as pltpu


def _round_up(x, m):
    return ((x + m - 1) // m) * m


# ----------------------------------------------------------------------------
# Pass 1: tiled conv-as-matmul + per-tile channel statistics
# ----------------------------------------------------------------------------
def _conv_stats_kernel(p_ref, w_ref, y_ref, stats_ref):
    # (TM, K) @ (K, Cp) on the MXU, bf16 inputs, f32 accumulation.
    y = jnp.dot(p_ref[...], w_ref[...], preferred_element_type=jnp.float32)
    y_ref[...] = y.astype(y_ref.dtype)
    # Per-channel partial sums for the two-phase BatchNorm reduction.
    stats_ref[0, 0:1, :] = jnp.sum(y, axis=0, keepdims=True)
    stats_ref[0, 1:2, :] = jnp.sum(y * y, axis=0, keepdims=True)


# ----------------------------------------------------------------------------
# Pass 2: tiled BN epilogue (single FMA) + optional residual + optional ReLU
# ----------------------------------------------------------------------------
def _bn_finalize_kernel(*refs, has_residual, apply_relu):
    if has_residual:
        y_ref, sc_ref, sh_ref, r_ref, o_ref = refs
    else:
        y_ref, sc_ref, sh_ref, o_ref = refs
        r_ref = None

    y = y_ref[...].astype(jnp.float32)
    out = y * sc_ref[...] + sh_ref[...]          # BN collapsed to one FMA
    if r_ref is not None:
        out = out + r_ref[...].astype(jnp.float32)
    if apply_relu:
        out = jnp.maximum(out, 0.0)
    o_ref[...] = out.astype(o_ref.dtype)


# ----------------------------------------------------------------------------
# Wrapper: one conv + training-mode BN (+residual)(+ReLU)
# ----------------------------------------------------------------------------
def conv_bn_pallas(patches, w_mat, gamma, beta, *, residual=None,
                   apply_relu=True, eps=1e-5, out_dtype=jnp.float32,
                   tm_target=512):
    """patches: (M, K), w_mat: (K, Cout), gamma/beta: (Cout,).

    NOTE: the conv bias is intentionally NOT an argument -- under training-mode
    BatchNorm, (y + b) - mean(y + b) == y - mean(y), so it is a no-op.
    """
    M, K = patches.shape
    Cout = w_mat.shape[1]
    Cp = _round_up(Cout, 128)                     # lane-dense output channels

    # TODO(synk): TM could be re-derived per TPU generation (v7x has 64 MiB VMEM);
    # 512 rows keeps 2x double-buffered tiles well under the scoped limit.
    TM = min(tm_target, _round_up(M, 16))
    Mp = _round_up(M, TM)
    T = Mp // TM

    p = patches.astype(jnp.bfloat16)
    p = jnp.pad(p, ((0, Mp - M), (0, 0)))         # zero rows -> contribute 0 stats
    w = jnp.pad(w_mat.astype(jnp.bfloat16), ((0, 0), (0, Cp - Cout)))

    cparams = pltpu.CompilerParams(
        dimension_semantics=("parallel",),
        vmem_limit_bytes=64 * 1024 * 1024,
    )

    # ---- pass 1: matmul + partial per-channel statistics ----
    y_raw, partial = pl.pallas_call(
        _conv_stats_kernel,
        out_shape=(jax.ShapeDtypeStruct((Mp, Cp), jnp.bfloat16),
                   jax.ShapeDtypeStruct((T, 2, Cp), jnp.float32)),
        grid=(T,),
        in_specs=[pl.BlockSpec((TM, K), lambda i: (i, 0)),
                  pl.BlockSpec((K, Cp), lambda i: (0, 0))],
        out_specs=(pl.BlockSpec((TM, Cp), lambda i: (i, 0)),
                   pl.BlockSpec((1, 2, Cp), lambda i: (i, 0, 0))),
        compiler_params=cparams,
    )(p, w)

    # ---- tiny (2, Cp) reduction + scale/shift folding in XLA ----
    sums = jnp.sum(partial, axis=0)               # (2, Cp) f32
    mean = sums[0] / M                            # zero-padded rows add nothing
    var = jnp.maximum(sums[1] / M - mean * mean, 0.0)   # biased variance
    g = jnp.pad(gamma.astype(jnp.float32), (0, Cp - Cout))
    b = jnp.pad(beta.astype(jnp.float32), (0, Cp - Cout))
    scale = g * jax.lax.rsqrt(var + eps)
    shift = b - mean * scale

    inputs = [y_raw, scale.reshape(1, Cp), shift.reshape(1, Cp)]
    in_specs = [pl.BlockSpec((TM, Cp), lambda i: (i, 0)),
                pl.BlockSpec((1, Cp), lambda i: (0, 0)),
                pl.BlockSpec((1, Cp), lambda i: (0, 0))]
    if residual is not None:
        r = jnp.pad(residual, ((0, Mp - M), (0, Cp - Cout)))
        inputs.append(r)
        in_specs.append(pl.BlockSpec((TM, Cp), lambda i: (i, 0)))

    kernel = functools.partial(_bn_finalize_kernel,
                               has_residual=residual is not None,
                               apply_relu=apply_relu)

    out = pl.pallas_call(
        kernel,
        out_shape=jax.ShapeDtypeStruct((Mp, Cp), out_dtype),
        grid=(T,),
        in_specs=in_specs,
        out_specs=pl.BlockSpec((TM, Cp), lambda i: (i, 0)),
        compiler_params=cparams,
    )(*inputs)

    return out[:M, :Cout]


# ----------------------------------------------------------------------------
# JAX glue: im2col extraction, weight reshapes, module wiring
# ----------------------------------------------------------------------------
def im2col_nhwc(x, ksize, stride, padding):
    """x: (N, H, W, C) -> patches (N*Ho*Wo, ksize*ksize*C), plus Ho, Wo."""
    N, H, W, C = x.shape
    if padding:
        x = jnp.pad(x, ((0, 0), (padding, padding), (padding, padding), (0, 0)))
    Hp, Wp = H + 2 * padding, W + 2 * padding
    Ho = (Hp - ksize) // stride + 1
    Wo = (Wp - ksize) // stride + 1
    cols = []
    for kh in range(ksize):
        for kw in range(ksize):
            cols.append(
                x[:,
                  kh:kh + (Ho - 1) * stride + 1:stride,
                  kw:kw + (Wo - 1) * stride + 1:stride, :]
            )
    p = jnp.stack(cols, axis=3)  # (N, Ho, Wo, k*k, C)
    return p.reshape(N * Ho * Wo, ksize * ksize * C), Ho, Wo


def _w_oihw_to_mat(w_oihw):
    """(Cout, Cin, kh, kw) -> (kh*kw*Cin, Cout), matching im2col (kh, kw, c) order."""
    cout, cin, kh, kw = w_oihw.shape
    return jnp.transpose(w_oihw, (2, 3, 1, 0)).reshape(kh * kw * cin, cout)


def block_forward(x_nchw, params, stride, padding):
    """Pallas implementation of Block.forward. Input/output are NCHW (PyTorch)."""
    x = jnp.transpose(x_nchw, (0, 2, 3, 1)).astype(jnp.float32)  # -> NHWC
    N, H, W, Cin = x.shape
    Cout = params["w1"].shape[0]
    x_bf = x.astype(jnp.bfloat16)                 # bf16 streaming side

    # conv1 + norm1 + relu1  (intermediate kept in bf16 to halve HBM traffic)
    p1, Ho, Wo = im2col_nhwc(x_bf, 3, stride, padding)
    y1 = conv_bn_pallas(p1, _w_oihw_to_mat(params["w1"]),
                        params["g1"], params["be1"],
                        apply_relu=True, out_dtype=jnp.bfloat16)
    y1 = y1.reshape(N, Ho, Wo, Cout)

    # residual path (identity, or 1x1-conv + BN downsample if stride != 1)
    if stride != 1:
        pd, _, _ = im2col_nhwc(x_bf, 1, stride, 0)
        res = conv_bn_pallas(pd, _w_oihw_to_mat(params["wd"]),
                             params["gd"], params["bed"],
                             apply_relu=False, out_dtype=jnp.float32)
    else:
        res = x.reshape(N * H * W, Cin)  # requires Cin == Cout (as in PyTorch)

    # conv2 + norm2 + residual add + relu2 (fused in the epilogue pass)
    p2, _, _ = im2col_nhwc(y1, 3, 1, 1)
    y2 = conv_bn_pallas(p2, _w_oihw_to_mat(params["w2"]),
                        params["g2"], params["be2"],
                        residual=res, apply_relu=True, out_dtype=jnp.float32)

    return jnp.transpose(y2.reshape(N, Ho, Wo, Cout), (0, 3, 1, 2))  # -> NCHW


# ----------------------------------------------------------------------------
# Pure-JAX reference (mirrors PyTorch forward in training mode) for sanity check
# ----------------------------------------------------------------------------
def block_reference(x_nchw, params, stride, padding, eps=1e-5):
    x = jnp.transpose(x_nchw, (0, 2, 3, 1)).astype(jnp.float32)

    def conv(x, w, b, s, p):
        wh = jnp.transpose(w, (2, 3, 1, 0))  # OIHW -> HWIO
        y = jax.lax.conv_general_dilated(
            x, wh, (s, s), [(p, p), (p, p)],
            dimension_numbers=("NHWC", "HWIO", "NHWC"),
            precision=jax.lax.Precision.HIGHEST)
        return y + b

    def bn(x, g, b):
        m = jnp.mean(x, axis=(0, 1, 2), keepdims=True)
        v = jnp.mean(jnp.square(x - m), axis=(0, 1, 2), keepdims=True)
        return (x - m) * jax.lax.rsqrt(v + eps) * g + b

    y = conv(x, params["w1"], params["b1"], stride, padding)
    y = jnp.maximum(bn(y, params["g1"], params["be1"]), 0.0)
    y = conv(y, params["w2"], params["b2"], 1, 1)
    y = bn(y, params["g2"], params["be2"])
    if stride != 1:
        r = bn(conv(x, params["wd"], params["bd"], stride, 0),
               params["gd"], params["bed"])
    else:
        r = x
    out = jnp.maximum(y + r, 0.0)
    return jnp.transpose(out, (0, 3, 1, 2))


# ----------------------------------------------------------------------------
# Deterministic parameter initialization (shapes from Block.__init__)
# ----------------------------------------------------------------------------
def init_params(key, cin, cout, stride):
    ks = jax.random.split(key, 12)
    p = {
        "w1": 0.1 * jax.random.normal(ks[0], (cout, cin, 3, 3), jnp.float32),
        "b1": 0.05 * jax.random.normal(ks[1], (cout,), jnp.float32),
        "g1": 1.0 + 0.1 * jax.random.normal(ks[2], (cout,), jnp.float32),
        "be1": 0.1 * jax.random.normal(ks[3], (cout,), jnp.float32),
        "w2": 0.1 * jax.random.normal(ks[4], (cout, cout, 3, 3), jnp.float32),
        "b2": 0.05 * jax.random.normal(ks[5], (cout,), jnp.float32),
        "g2": 1.0 + 0.1 * jax.random.normal(ks[6], (cout,), jnp.float32),
        "be2": 0.1 * jax.random.normal(ks[7], (cout,), jnp.float32),
    }
    if stride != 1:
        p["wd"] = 0.1 * jax.random.normal(ks[8], (cout, cin, 1, 1), jnp.float32)
        p["bd"] = 0.05 * jax.random.normal(ks[9], (cout,), jnp.float32)
        p["gd"] = 1.0 + 0.1 * jax.random.normal(ks[10], (cout,), jnp.float32)
        p["bed"] = 0.1 * jax.random.normal(ks[11], (cout,), jnp.float32)
    return p


if __name__ == "__main__":
    root = jax.random.PRNGKey(0)
    kx1, kp1, kx2, kp2 = jax.random.split(root, 4)

    # Case 1: stride=1, padding=1, in_channels == out_channels (identity shortcut)
    x1 = jax.random.normal(kx1, (2, 8, 16, 16), jnp.float32)   # NCHW
    params1 = init_params(kp1, cin=8, cout=8, stride=1)
    out1 = block_forward(x1, params1, stride=1, padding=1)
    out1 = jax.block_until_ready(out1)
    ref1 = block_reference(x1, params1, stride=1, padding=1)
    assert out1.shape == ref1.shape == (2, 8, 16, 16)
    assert jnp.allclose(out1, ref1, rtol=5e-2, atol=5e-2), "stride=1 mismatch"

    # Case 2: stride=2, padding=1, channel expansion (downsample shortcut path)
    x2 = jax.random.normal(kx2, (2, 8, 16, 16), jnp.float32)   # NCHW
    params2 = init_params(kp2, cin=8, cout=16, stride=2)
    out2 = block_forward(x2, params2, stride=2, padding=1)
    out2 = jax.block_until_ready(out2)
    ref2 = block_reference(x2, params2, stride=2, padding=1)
    assert out2.shape == ref2.shape == (2, 16, 8, 8)
    assert jnp.allclose(out2, ref2, rtol=5e-2, atol=5e-2), "stride=2 mismatch"

    print("KERNEL_OK")
</pallas_src>

<mosaic_0001>
module attributes {stable_mosaic.version = 11 : i64} {
  func.func @_conv_stats_kernel(%arg0: i32, %arg1: memref<512x72xbf16, #tpu.memory_space<vmem>>, %arg2: memref<72x128xbf16, #tpu.memory_space<vmem>>, %arg3: memref<512x128xbf16, #tpu.memory_space<vmem>>, %arg4: memref<1x2x128xf32, #tpu.memory_space<vmem>>) attributes {dimension_semantics = [#tpu.dimension_semantics<parallel>], iteration_bounds = array<i64: 1>, scalar_prefetch = 0 : i64, scratch_operands = 0 : i64, tpu.core_type = #tpu.core_type<tc>, window_params = [{transform_indices = @transform_0, window_bounds = array<i64: 512, 72>}, {pipeline_mode = #tpu.pipeline_mode<synchronous>, transform_indices = @transform_1, window_bounds = array<i64: 72, 128>}, {transform_indices = @transform_2, window_bounds = array<i64: 512, 128>}, {transform_indices = @transform_3, window_bounds = array<i64: 1, 2, 128>}]} {
    %c0 = arith.constant 0 : index
    %c0_0 = arith.constant 0 : index
    %0 = vector.load %arg1[%c0, %c0_0] : memref<512x72xbf16, #tpu.memory_space<vmem>>, vector<512x72xbf16>
    %c0_1 = arith.constant 0 : index
    %c0_2 = arith.constant 0 : index
    %1 = vector.load %arg2[%c0_1, %c0_2] : memref<72x128xbf16, #tpu.memory_space<vmem>>, vector<72x128xbf16>
    %cst = arith.constant dense<0.000000e+00> : vector<512x128xf32>
    %2 = tpu.matmul %0, %1, %cst {dimension_numbers = #tpu.dot_dimension_numbers<[1], [0], [0], [1], [0, 0, 1, 1], [], []>} : vector<512x72xbf16>, vector<72x128xbf16>, vector<512x128xf32> -> vector<512x128xf32>
    %3 = arith.truncf %2 : vector<512x128xf32> to vector<512x128xbf16>
    %c0_3 = arith.constant 0 : index
    %c0_4 = arith.constant 0 : index
    %4 = vector.load %arg3[%c0_3, %c0_4] : memref<512x128xbf16, #tpu.memory_space<vmem>>, vector<512x128xbf16>
    tpu.vector_store %arg3[%c0_3, %c0_4], %3 {strides = array<i32>} : memref<512x128xbf16, #tpu.memory_space<vmem>>, vector<512x128xbf16>,
    %cst_5 = arith.constant dense<0.000000e+00> : vector<128xf32>
    %5 = vector.multi_reduction <add>, %2, %cst_5 [0] : vector<512x128xf32> to vector<128xf32>
    %6 = vector.shape_cast %5 : vector<128xf32> to vector<1x128xf32>
    %c0_6 = arith.constant 0 : index
    %c0_7 = arith.constant 0 : index
    %c0_8 = arith.constant 0 : index
    %7 = vector.load %arg4[%c0_6, %c0_7, %c0_8] : memref<1x2x128xf32, #tpu.memory_space<vmem>>, vector<1x1x128xf32>
    %8 = vector.shape_cast %7 : vector<1x1x128xf32> to vector<1x128xf32>
    %9 = vector.shape_cast %6 : vector<1x128xf32> to vector<1x1x128xf32>
    tpu.vector_store %arg4[%c0_6, %c0_7, %c0_8], %9 {strides = array<i32>} : memref<1x2x128xf32, #tpu.memory_space<vmem>>, vector<1x1x128xf32>,
    %10 = arith.mulf %2, %2 : vector<512x128xf32>
    %cst_9 = arith.constant dense<0.000000e+00> : vector<128xf32>
    %11 = vector.multi_reduction <add>, %10, %cst_9 [0] : vector<512x128xf32> to vector<128xf32>
    %12 = vector.shape_cast %11 : vector<128xf32> to vector<1x128xf32>
    %c0_10 = arith.constant 0 : index
    %c1 = arith.constant 1 : index
    %c0_11 = arith.constant 0 : index
    %13 = vector.load %arg4[%c0_10, %c1, %c0_11] : memref<1x2x128xf32, #tpu.memory_space<vmem>>, vector<1x1x128xf32>
    %14 = vector.shape_cast %13 : vector<1x1x128xf32> to vector<1x128xf32>
    %15 = vector.shape_cast %12 : vector<1x128xf32> to vector<1x1x128xf32>
    tpu.vector_store %arg4[%c0_10, %c1, %c0_11], %15 {strides = array<i32>} : memref<1x2x128xf32, #tpu.memory_space<vmem>>, vector<1x1x128xf32>,
    return
  }
  func.func @transform_0(%arg0: i32) -> (i32, i32) {
    %c0_i32 = arith.constant 0 : i32
    %c0_i32_0 = arith.constant 0 : i32
    return %arg0, %c0_i32 : i32, i32
  }
  func.func @transform_1(%arg0: i32) -> (i32, i32) {
    %c0_i32 = arith.constant 0 : i32
    %c0_i32_0 = arith.constant 0 : i32
    %c0_i32_1 = arith.constant 0 : i32
    return %c0_i32, %c0_i32_0 : i32, i32
  }
  func.func @transform_2(%arg0: i32) -> (i32, i32) {
    %c0_i32 = arith.constant 0 : i32
    %c0_i32_0 = arith.constant 0 : i32
    return %arg0, %c0_i32 : i32, i32
  }
  func.func @transform_3(%arg0: i32) -> (i32, i32, i32) {
    %c0_i32 = arith.constant 0 : i32
    %c0_i32_0 = arith.constant 0 : i32
    %c0_i32_1 = arith.constant 0 : i32
    return %arg0, %c0_i32, %c0_i32_0 : i32, i32, i32
  }
}

</mosaic_0001>

<llo_original>
// kernel: tpu_custom_call.1
$region0: #{tpu_custom_call.1}
  #allocation0 [shape = 'u32[]', space=smem, size = 0x4, offset = 0x4, fixed_abs, tag = 'smem constant byte address 0x4 - core index']
  #allocation1 [shape = 'u32[72,128]{1,0:T(1,128)}', space=vmem, size = 0x9000, scoped, tag = 'internal scratch']
  %s0 = inlined_call_operand.vmem [shape: bf16[512,72], index: 0, kind: input, shape index: {}]
  %s1 = inlined_call_operand.vmem [shape: bf16[72,128], index: 1, kind: input, shape index: {}]
  %s2 = inlined_call_operand.hbm [shape: bf16[512,128], index: 2, kind: output, shape index: {0}]
  %s3 = inlined_call_operand.hbm [shape: f32[1,2,128], index: 3, kind: output, shape index: {1}]
  %4 = xla_tuple %s2, %s3
  %s5 = sld [smem:[#allocation0]]
  $region26: #{tpu_custom_call.1} parent=0
    _
  %s7 = ssub.s32 1, %s5
  %s8 = scalar_select 0, %s7, %s5
  $region1: #{tpu_custom_call.1} parent=0
    #allocation2 [shape = 'u8[131072]{0}', space=vmem, size = 0x20000, scoped, tag = 'output window, operand 0, single buffered']
    #allocation3 [shape = 's32[1]{0}', space=sflag, size = 0x4, scoped, tag = 'scoped memory for tpu_custom_call.1']
    #allocation4 [shape = 'u8[1024]{0}', space=vmem, size = 0x400, scoped, tag = 'output window, operand 1, single buffered']
    #allocation5 [shape = 's32[1]{0}', space=sflag, size = 0x4, scoped, tag = 'scoped memory for tpu_custom_call.1']
    %9 = vsyncpa [#allocation3], 0
    %10 = vsyncpa [#allocation5], 0
    // Predicated region
    $region2: #{tpu_custom_call.1} parent=1 // pred_check
      _
    $region3: #{tpu_custom_call.1} parent=1 // pred_check_branch
      %12 = sbr.rel (0) target = $region5
    $region4: #{tpu_custom_call.1} parent=1 // pred_region
      _
    $region5: #{tpu_custom_call.1} parent=1 // pred_fallthru
      _
    // Predicated region
    $region6: #{tpu_custom_call.1} parent=1 // pred_check
      _
    $region7: #{tpu_custom_call.1} parent=1 // pred_check_branch
      %14 = sbr.rel (0) target = $region9
    $region8: #{tpu_custom_call.1} parent=1 // pred_region
      _
    $region9: #{tpu_custom_call.1} parent=1 // pred_fallthru
      _
    %v16 = vld [vmem:[%s0] sm:$0xf]
    %v17 = vld [vmem:[%s0 + $0x4] sm:$0xf]
    %v18 = vld [vmem:[%s0 + $0x8] sm:$0xf]
    %v19 = vld [vmem:[%s0 + $0xc] sm:$0xf]
    %v20 = vld [vmem:[%s0 + $0x10] sm:$0xf]
    %v21 = vld [vmem:[%s0 + $0x14] sm:$0xf]
    %v22 = vld [vmem:[%s0 + $0x18] sm:$0xf]
    %v23 = vld [vmem:[%s0 + $0x1c] sm:$0xf]
    %v24 = vld [vmem:[%s0 + $0x20] sm:$0xf]
    %v25 = vld [vmem:[%s0 + $0x24] sm:$0xf]
    %v26 = vld [vmem:[%s0 + $0x28] sm:$0xf]
    %v27 = vld [vmem:[%s0 + $0x2c] sm:$0xf]
    %v28 = vld [vmem:[%s0 + $0x30] sm:$0xf]
    %v29 = vld [vmem:[%s0 + $0x34] sm:$0xf]
    %v30 = vld [vmem:[%s0 + $0x38] sm:$0xf]
    %v31 = vld [vmem:[%s0 + $0x3c] sm:$0xf]
    %v32 = vld [vmem:[%s0 + $0x40] sm:$0xf]
    %v33 = vld [vmem:[%s0 + $0x44] sm:$0xf]
    %v34 = vld [vmem:[%s0 + $0x48] sm:$0xf]
    %v35 = vld [vmem:[%s0 + $0x4c] sm:$0xf]
    %v36 = vld [vmem:[%s0 + $0x50] sm:$0xf]
    %v37 = vld [vmem:[%s0 + $0x54] sm:$0xf]
    %v38 = vld [vmem:[%s0 + $0x58] sm:$0xf]
    %v39 = vld [vmem:[%s0 + $0x5c] sm:$0xf]
    %v40 = vld [vmem:[%s0 + $0x60] sm:$0xf]
    %v41 = vld [vmem:[%s0 + $0x64] sm:$0xf]
    %v42 = vld [vmem:[%s0 + $0x68] sm:$0xf]
    %v43 = vld [vmem:[%s0 + $0x6c] sm:$0xf]
    %v44 = vld [vmem:[%s0 + $0x70] sm:$0xf]
    %v45 = vld [vmem:[%s0 + $0x74] sm:$0xf]
    %v46 = vld [vmem:[%s0 + $0x78] sm:$0xf]
    %v47 = vld [vmem:[%s0 + $0x7c] sm:$0xf]
    %v48 = vld [vmem:[%s0 + $0x80] sm:$0xf]
    %v49 = vld [vmem:[%s0 + $0x84] sm:$0xf]
    %v50 = vld [vmem:[%s0 + $0x88] sm:$0xf]
    %v51 = vld [vmem:[%s0 + $0x8c] sm:$0xf]
    %v52 = vld [vmem:[%s0 + $0x90] sm:$0xf]
    %v53 = vld [vmem:[%s0 + $0x94] sm:$0xf]
    %v54 = vld [vmem:[%s0 + $0x98] sm:$0xf]
    %v55 = vld [vmem:[%s0 + $0x9c] sm:$0xf]
    %v56 = vld [vmem:[%s0 + $0xa0] sm:$0xf]
    %v57 = vld [vmem:[%s0 + $0xa4] sm:$0xf]
    %v58 = vld [vmem:[%s0 + $0xa8] sm:$0xf]
    %v59 = vld [vmem:[%s0 + $0xac] sm:$0xf]
    %v60 = vld [vmem:[%s0 + $0xb0] sm:$0xf]
    %v61 = vld [vmem:[%s0 + $0xb4] sm:$0xf]
    %v62 = vld [vmem:[%s0 + $0xb8] sm:$0xf]
    %v63 = vld [vmem:[%s0 + $0xbc] sm:$0xf]
    %v64 = vld [vmem:[%s0 + $0xc0] sm:$0xf]
    %v65 = vld [vmem:[%s0 + $0xc4] sm:$0xf]
    %v66 = vld [vmem:[%s0 + $0xc8] sm:$0xf]
    %v67 = vld [vmem:[%s0 + $0xcc] sm:$0xf]
    %v68 = vld [vmem:[%s0 + $0xd0] sm:$0xf]
    %v69 = vld [vmem:[%s0 + $0xd4] sm:$0xf]
    %v70 = vld [vmem:[%s0 + $0xd8] sm:$0xf]
    %v71 = vld [vmem:[%s0 + $0xdc] sm:$0xf]
    %v72 = vld [vmem:[%s0 + $0xe0] sm:$0xf]
    %v73 = vld [vmem:[%s0 + $0xe4] sm:$0xf]
    %v74 = vld [vmem:[%s0 + $0xe8] sm:$0xf]
    %v75 = vld [vmem:[%s0 + $0xec] sm:$0xf]
    %v76 = vld [vmem:[%s0 + $0xf0] sm:$0xf]
    %v77 = vld [vmem:[%s0 + $0xf4] sm:$0xf]
    %v78 = vld [vmem:[%s0 + $0xf8] sm:$0xf]
    %v79 = vld [vmem:[%s0 + $0xfc] sm:$0xf]
    %v80 = vld [vmem:[%s1] sm:$0xf]
    %v81 = vld [vmem:[%s1 + $0x4] sm:$0xf]
    %v82 = vld [vmem:[%s1 + $0x8] sm:$0xf]
    %v83 = vld [vmem:[%s1 + $0xc] sm:$0xf]
    %v84 = vld [vmem:[%s1 + $0x10] sm:$0xf]
    %v85 = vld [vmem:[%s1 + $0x14] sm:$0xf]
    %v86 = vld [vmem:[%s1 + $0x18] sm:$0xf]
    %v87 = vld [vmem:[%s1 + $0x1c] sm:$0xf]
    %v88 = vld [vmem:[%s1 + $0x20] sm:$0xf]
    %v153 = vunpack.c.l.b16 %v16
    %v154 = vunpack.c.l.b16 %v17
    %v155 = vunpack.c.l.b16 %v18
    %v156 = vunpack.c.l.b16 %v19
    %v157 = vunpack.c.l.b16 %v20
    %v158 = vunpack.c.l.b16 %v21
    %v159 = vunpack.c.l.b16 %v22
    %v160 = vunpack.c.l.b16 %v23
    %v161 = vunpack.c.l.b16 %v24
    %v162 = vunpack.c.l.b16 %v25
    %v163 = vunpack.c.l.b16 %v26
    %v164 = vunpack.c.l.b16 %v27
    %v165 = vunpack.c.l.b16 %v28
    %v166 = vunpack.c.l.b16 %v29
    %v167 = vunpack.c.l.b16 %v30
    %v168 = vunpack.c.l.b16 %v31
    %v169 = vunpack.c.l.b16 %v32
    %v170 = vunpack.c.l.b16 %v33
    %v171 = vunpack.c.l.b16 %v34
    %v172 = vunpack.c.l.b16 %v35
    %v173 = vunpack.c.l.b16 %v36
    %v174 = vunpack.c.l.b16 %v37
    %v175 = vunpack.c.l.b16 %v38
    %v176 = vunpack.c.l.b16 %v39
    %v177 = vunpack.c.l.b16 %v40
    %v178 = vunpack.c.l.b16 %v41
    %v179 = vunpack.c.l.b16 %v42
    %v180 = vunpack.c.l.b16 %v43
    %v181 = vunpack.c.l.b16 %v44
    %v182 = vunpack.c.l.b16 %v45
    %v183 = vunpack.c.l.b16 %v46
    %v184 = vunpack.c.l.b16 %v47
    %v185 = vunpack.c.l.b16 %v48
    %v186 = vunpack.c.l.b16 %v49
    %v187 = vunpack.c.l.b16 %v50
    %v188 = vunpack.c.l.b16 %v51
    %v189 = vunpack.c.l.b16 %v52
    %v190 = vunpack.c.l.b16 %v53
    %v191 = vunpack.c.l.b16 %v54
    %v192 = vunpack.c.l.b16 %v55
    %v193 = vunpack.c.l.b16 %v56
    %v194 = vunpack.c.l.b16 %v57
    %v195 = vunpack.c.l.b16 %v58
    %v196 = vunpack.c.l.b16 %v59
    %v197 = vunpack.c.l.b16 %v60
    %v198 = vunpack.c.l.b16 %v61
    %v199 = vunpack.c.l.b16 %v62
    %v200 = vunpack.c.l.b16 %v63
    %v201 = vunpack.c.l.b16 %v64
    %v202 = vunpack.c.l.b16 %v65
    %v203 = vunpack.c.l.b16 %v66
    %v204 = vunpack.c.l.b16 %v67
    %v205 = vunpack.c.l.b16 %v68
    %v206 = vunpack.c.l.b16 %v69
    %v207 = vunpack.c.l.b16 %v70
    %v208 = vunpack.c.l.b16 %v71
    %v209 = vunpack.c.l.b16 %v72
    %v210 = vunpack.c.l.b16 %v73
    %v211 = vunpack.c.l.b16 %v74
    %v212 = vunpack.c.l.b16 %v75
    %v213 = vunpack.c.l.b16 %v76
    %v214 = vunpack.c.l.b16 %v77
    %v215 = vunpack.c.l.b16 %v78
    %v216 = vunpack.c.l.b16 %v79
    %v217 = vpack.c.b16 %v154, %v153
    %v218 = vpack.c.b16 %v156, %v155
    %v219 = vpack.c.b16 %v158, %v157
    %v220 = vpack.c.b16 %v160, %v159
    %v221 = vpack.c.b16 %v162, %v161
    %v222 = vpack.c.b16 %v164, %v163
    %v223 = vpack.c.b16 %v166, %v165
    %v224 = vpack.c.b16 %v168, %v167
    %v225 = vpack.c.b16 %v170, %v169
    %v226 = vpack.c.b16 %v172, %v171
    %v227 = vpack.c.b16 %v174, %v173
    %v228 = vpack.c.b16 %v176, %v175
    %v229 = vpack.c.b16 %v178, %v177
    %v230 = vpack.c.b16 %v180, %v179
    %v231 = vpack.c.b16 %v182, %v181
    %v232 = vpack.c.b16 %v184, %v183
    %v233 = vpack.c.b16 %v186, %v185
    %v234 = vpack.c.b16 %v188, %v187
    %v235 = vpack.c.b16 %v190, %v189
    %v236 = vpack.c.b16 %v192, %v191
    %v237 = vpack.c.b16 %v194, %v193
    %v238 = vpack.c.b16 %v196, %v195
    %v239 = vpack.c.b16 %v198, %v197
    %v240 = vpack.c.b16 %v200, %v199
    %v241 = vpack.c.b16 %v202, %v201
    %v242 = vpack.c.b16 %v204, %v203
    %v243 = vpack.c.b16 %v206, %v205
    %v244 = vpack.c.b16 %v208, %v207
    %v245 = vpack.c.b16 %v210, %v209
    %v246 = vpack.c.b16 %v212, %v211
    %v247 = vpack.c.b16 %v214, %v213
    %v248 = vpack.c.b16 %v216, %v215
    %v258 = vunpack.c.l.b16 %v80
    %v259 = vunpack.c.l.b16 %v81
    %v260 = vunpack.c.l.b16 %v82
    %v261 = vunpack.c.l.b16 %v83
    %v262 = vunpack.c.l.b16 %v84
    %v263 = vunpack.c.l.b16 %v85
    %v264 = vunpack.c.l.b16 %v86
    %v265 = vunpack.c.l.b16 %v87
    %v266 = vunpack.c.l.b16 %v88
    %v267 = vpack.c.b16 %v259, %v258
    %v268 = vpack.c.b16 %v261, %v260
    %v269 = vpack.c.b16 %v263, %v262
    %v270 = vpack.c.b16 %v265, %v264
    %v271 = vpack.c.b16 %v266, %v266
    %vm276 = vcmask 588800
    %v278 = vsel %vm276, %v217, 0
    %v281 = vsel %vm276, %v218, 0
    %v284 = vsel %vm276, %v219, 0
    %v287 = vsel %vm276, %v220, 0
    %v290 = vsel %vm276, %v221, 0
    %v293 = vsel %vm276, %v222, 0
    %v296 = vsel %vm276, %v223, 0
    %v299 = vsel %vm276, %v224, 0
    %v302 = vsel %vm276, %v225, 0
    %v305 = vsel %vm276, %v226, 0
    %v308 = vsel %vm276, %v227, 0
    %v311 = vsel %vm276, %v228, 0
    %v314 = vsel %vm276, %v229, 0
    %v317 = vsel %vm276, %v230, 0
    %v320 = vsel %vm276, %v231, 0
    %v323 = vsel %vm276, %v232, 0
    %v326 = vsel %vm276, %v233, 0
    %v329 = vsel %vm276, %v234, 0
    %v332 = vsel %vm276, %v235, 0
    %v335 = vsel %vm276, %v236, 0
    %v338 = vsel %vm276, %v237, 0
    %v341 = vsel %vm276, %v238, 0
    %v344 = vsel %vm276, %v239, 0
    %v347 = vsel %vm276, %v240, 0
    %v350 = vsel %vm276, %v241, 0
    %v353 = vsel %vm276, %v242, 0
    %v356 = vsel %vm276, %v243, 0
    %v359 = vsel %vm276, %v244, 0
    %v362 = vsel %vm276, %v245, 0
    %v365 = vsel %vm276, %v246, 0
    %v368 = vsel %vm276, %v247, 0
    %v371 = vsel %vm276, %v248, 0
    %vm373 = vcmask 1043456
    %v375 = vsel %vm373, %v271, 0
    %377 = vmatpush.bf16.msra.mxu0 0
    %378 = vmatpush.bf16.msra.mxu0 0
    %379 = vmatpush.bf16.msra.mxu0 0
    %380 = vmatpush.bf16.msra.mxu0 %v375
    %381 = vmatpush.bf16.msra.mxu0 %v270
    %382 = vmatpush.bf16.msra.mxu0 %v269
    %383 = vmatpush.bf16.msra.mxu0 %v268
    %384 = vmatpush.bf16.msra.mxu0 %v267
    %385 = vmatmul.bf16.gmra.mxu0 %v278
    %v386 = vpop.f32.mrf.mxu0
    %v387 = vadd.f32 0.0, %v386
    %v388 = vpop.f32.mrf.mxu0
    %v389 = vadd.f32 0.0, %v388
    %390 = vmatmul.bf16.gmra.mxu0 %v281
    %v391 = vpop.f32.mrf.mxu0
    %v392 = vadd.f32 0.0, %v391
    %v393 = vpop.f32.mrf.mxu0
    %v394 = vadd.f32 0.0, %v393
    %395 = vmatmul.bf16.gmra.mxu0 %v284
    %v396 = vpop.f32.mrf.mxu0
    %v397 = vadd.f32 0.0, %v396
    %v398 = vpop.f32.mrf.mxu0
    %v399 = vadd.f32 0.0, %v398
    %400 = vmatmul.bf16.gmra.mxu0 %v287
    %v401 = vpop.f32.mrf.mxu0
    %v402 = vadd.f32 0.0, %v401
    %v403 = vpop.f32.mrf.mxu0
    %v404 = vadd.f32 0.0, %v403
    %405 = vmatmul.bf16.gmra.mxu0 %v290
    %v406 = vpop.f32.mrf.mxu0
    %v407 = vadd.f32 0.0, %v406
    %v408 = vpop.f32.mrf.mxu0
    %v409 = vadd.f32 0.0, %v408
    %410 = vmatmul.bf16.gmra.mxu0 %v293
    %v411 = vpop.f32.mrf.mxu0
    %v412 = vadd.f32 0.0, %v411
    %v413 = vpop.f32.mrf.mxu0
    %v414 = vadd.f32 0.0, %v413
    %415 = vmatmul.bf16.gmra.mxu0 %v296
    %v416 = vpop.f32.mrf.mxu0
    %v417 = vadd.f32 0.0, %v416
    %v418 = vpop.f32.mrf.mxu0
    %v419 = vadd.f32 0.0, %v418
    %420 = vmatmul.bf16.gmra.mxu0 %v299
    %v421 = vpop.f32.mrf.mxu0
    %v422 = vadd.f32 0.0, %v421
    %v423 = vpop.f32.mrf.mxu0
    %v424 = vadd.f32 0.0, %v423
    %425 = vmatmul.bf16.gmra.mxu0 %v302
    %v426 = vpop.f32.mrf.mxu0
    %v427 = vadd.f32 0.0, %v426
    %v428 = vpop.f32.mrf.mxu0
    %v429 = vadd.f32 0.0, %v428
    %430 = vmatmul.bf16.gmra.mxu0 %v305
    %v431 = vpop.f32.mrf.mxu0
    %v432 = vadd.f32 0.0, %v431
    %v433 = vpop.f32.mrf.mxu0
    %v434 = vadd.f32 0.0, %v433
    %435 = vmatmul.bf16.gmra.mxu0 %v308
    %v436 = vpop.f32.mrf.mxu0
    %v437 = vadd.f32 0.0, %v436
    %v438 = vpop.f32.mrf.mxu0
    %v439 = vadd.f32 0.0, %v438
    %440 = vmatmul.bf16.gmra.mxu0 %v311
    %v441 = vpop.f32.mrf.mxu0
    %v442 = vadd.f32 0.0, %v441
    %v443 = vpop.f32.mrf.mxu0
    %v444 = vadd.f32 0.0, %v443
    %445 = vmatmul.bf16.gmra.mxu0 %v314
    %v446 = vpop.f32.mrf.mxu0
    %v447 = vadd.f32 0.0, %v446
    %v448 = vpop.f32.mrf.mxu0
    %v449 = vadd.f32 0.0, %v448
    %450 = vmatmul.bf16.gmra.mxu0 %v317
    %v451 = vpop.f32.mrf.mxu0
    %v452 = vadd.f32 0.0, %v451
    %v453 = vpop.f32.mrf.mxu0
    %v454 = vadd.f32 0.0, %v453
    %455 = vmatmul.bf16.gmra.mxu0 %v320
    %v456 = vpop.f32.mrf.mxu0
    %v457 = vadd.f32 0.0, %v456
    %v458 = vpop.f32.mrf.mxu0
    %v459 = vadd.f32 0.0, %v458
    %460 = vmatmul.bf16.gmra.mxu0 %v323
    %v461 = vpop.f32.mrf.mxu0
    %v462 = vadd.f32 0.0, %v461
    %v463 = vpop.f32.mrf.mxu0
    %v464 = vadd.f32 0.0, %v463
    %465 = vmatmul.bf16.gmra.mxu0 %v326
    %v466 = vpop.f32.mrf.mxu0
    %v467 = vadd.f32 0.0, %v466
    %v468 = vpop.f32.mrf.mxu0
    %v469 = vadd.f32 0.0, %v468
    %470 = vmatmul.bf16.gmra.mxu0 %v329
    %v471 = vpop.f32.mrf.mxu0
    %v472 = vadd.f32 0.0, %v471
    %v473 = vpop.f32.mrf.mxu0
    %v474 = vadd.f32 0.0, %v473
    %475 = vmatmul.bf16.gmra.mxu0 %v332
    %v476 = vpop.f32.mrf.mxu0
    %v477 = vadd.f32 0.0, %v476
    %v478 = vpop.f32.mrf.mxu0
    %v479 = vadd.f32 0.0, %v478
    %480 = vmatmul.bf16.gmra.mxu0 %v335
    %v481 = vpop.f32.mrf.mxu0
    %v482 = vadd.f32 0.0, %v481
    %v483 = vpop.f32.mrf.mxu0
    %v484 = vadd.f32 0.0, %v483
    %485 = vmatmul.bf16.gmra.mxu0 %v338
    %v486 = vpop.f32.mrf.mxu0
    %v487 = vadd.f32 0.0, %v486
    %v488 = vpop.f32.mrf.mxu0
    %v489 = vadd.f32 0.0, %v488
    %490 = vmatmul.bf16.gmra.mxu0 %v341
    %v491 = vpop.f32.mrf.mxu0
    %v492 = vadd.f32 0.0, %v491
    %v493 = vpop.f32.mrf.mxu0
    %v494 = vadd.f32 0.0, %v493
    %495 = vmatmul.bf16.gmra.mxu0 %v344
    %v496 = vpop.f32.mrf.mxu0
    %v497 = vadd.f32 0.0, %v496
    %v498 = vpop.f32.mrf.mxu0
    %v499 = vadd.f32 0.0, %v498
    %500 = vmatmul.bf16.gmra.mxu0 %v347
    %v501 = vpop.f32.mrf.mxu0
    %v502 = vadd.f32 0.0, %v501
    %v503 = vpop.f32.mrf.mxu0
    %v504 = vadd.f32 0.0, %v503
    %505 = vmatmul.bf16.gmra.mxu0 %v350
    %v506 = vpop.f32.mrf.mxu0
    %v507 = vadd.f32 0.0, %v506
    %v508 = vpop.f32.mrf.mxu0
    %v509 = vadd.f32 0.0, %v508
    %510 = vmatmul.bf16.gmra.mxu0 %v353
    %v511 = vpop.f32.mrf.mxu0
    %v512 = vadd.f32 0.0, %v511
    %v513 = vpop.f32.mrf.mxu0
    %v514 = vadd.f32 0.0, %v513
    %515 = vmatmul.bf16.gmra.mxu0 %v356
    %v516 = vpop.f32.mrf.mxu0
    %v517 = vadd.f32 0.0, %v516
    %v518 = vpop.f32.mrf.mxu0
    %v519 = vadd.f32 0.0, %v518
    %520 = vmatmul.bf16.gmra.mxu0 %v359
    %v521 = vpop.f32.mrf.mxu0
    %v522 = vadd.f32 0.0, %v521
    %v523 = vpop.f32.mrf.mxu0
    %v524 = vadd.f32 0.0, %v523
    %525 = vmatmul.bf16.gmra.mxu0 %v362
    %v526 = vpop.f32.mrf.mxu0
    %v527 = vadd.f32 0.0, %v526
    %v528 = vpop.f32.mrf.mxu0
    %v529 = vadd.f32 0.0, %v528
    %530 = vmatmul.bf16.gmra.mxu0 %v365
    %v531 = vpop.f32.mrf.mxu0
    %v532 = vadd.f32 0.0, %v531
    %v533 = vpop.f32.mrf.mxu0
    %v534 = vadd.f32 0.0, %v533
    %535 = vmatmul.bf16.gmra.mxu0 %v368
    %v536 = vpop.f32.mrf.mxu0
    %v537 = vadd.f32 0.0, %v536
    %v538 = vpop.f32.mrf.mxu0
    %v539 = vadd.f32 0.0, %v538
    %540 = vmatmul.bf16.gmra.mxu0 %v371
    %v541 = vpop.f32.mrf.mxu0
    %v542 = vadd.f32 0.0, %v541
    %v543 = vpop.f32.mrf.mxu0
    %v544 = vadd.f32 0.0, %v543
    %545 = vdwg.mxu0
    %v546 = vpack.c.bf16 %v387, %v387
    %v547 = vpack.c.bf16 %v389, %v389
    %v548 = vpack.c.bf16 %v392, %v392
    %v549 = vpack.c.bf16 %v394, %v394
    %v550 = vpack.c.bf16 %v397, %v397
    %v551 = vpack.c.bf16 %v399, %v399
    %v552 = vpack.c.bf16 %v402, %v402
    %v553 = vpack.c.bf16 %v404, %v404
    %v554 = vpack.c.bf16 %v407, %v407
    %v555 = vpack.c.bf16 %v409, %v409
    %v556 = vpack.c.bf16 %v412, %v412
    %v557 = vpack.c.bf16 %v414, %v414
    %v558 = vpack.c.bf16 %v417, %v417
    %v559 = vpack.c.bf16 %v419, %v419
    %v560 = vpack.c.bf16 %v422, %v422
    %v561 = vpack.c.bf16 %v424, %v424
    %v562 = vpack.c.bf16 %v427, %v427
    %v563 = vpack.c.bf16 %v429, %v429
    %v564 = vpack.c.bf16 %v432, %v432
    %v565 = vpack.c.bf16 %v434, %v434
    %v566 = vpack.c.bf16 %v437, %v437
    %v567 = vpack.c.bf16 %v439, %v439
    %v568 = vpack.c.bf16 %v442, %v442
    %v569 = vpack.c.bf16 %v444, %v444
    %v570 = vpack.c.bf16 %v447, %v447
    %v571 = vpack.c.bf16 %v449, %v449
    %v572 = vpack.c.bf16 %v452, %v452
    %v573 = vpack.c.bf16 %v454, %v454
    %v574 = vpack.c.bf16 %v457, %v457
    %v575 = vpack.c.bf16 %v459, %v459
    %v576 = vpack.c.bf16 %v462, %v462
    %v577 = vpack.c.bf16 %v464, %v464
    %v578 = vpack.c.bf16 %v467, %v467
    %v579 = vpack.c.bf16 %v469, %v469
    %v580 = vpack.c.bf16 %v472, %v472
    %v581 = vpack.c.bf16 %v474, %v474
    %v582 = vpack.c.bf16 %v477, %v477
    %v583 = vpack.c.bf16 %v479, %v479
    %v584 = vpack.c.bf16 %v482, %v482
    %v585 = vpack.c.bf16 %v484, %v484
    %v586 = vpack.c.bf16 %v487, %v487
    %v587 = vpack.c.bf16 %v489, %v489
    %v588 = vpack.c.bf16 %v492, %v492
    %v589 = vpack.c.bf16 %v494, %v494
    %v590 = vpack.c.bf16 %v497, %v497
    %v591 = vpack.c.bf16 %v499, %v499
    %v592 = vpack.c.bf16 %v502, %v502
    %v593 = vpack.c.bf16 %v504, %v504
    %v594 = vpack.c.bf16 %v507, %v507
    %v595 = vpack.c.bf16 %v509, %v509
    %v596 = vpack.c.bf16 %v512, %v512
    %v597 = vpack.c.bf16 %v514, %v514
    %v598 = vpack.c.bf16 %v517, %v517
    %v599 = vpack.c.bf16 %v519, %v519
    %v600 = vpack.c.bf16 %v522, %v522
    %v601 = vpack.c.bf16 %v524, %v524
    %v602 = vpack.c.bf16 %v527, %v527
    %v603 = vpack.c.bf16 %v529, %v529
    %v604 = vpack.c.bf16 %v532, %v532
    %v605 = vpack.c.bf16 %v534, %v534
    %v606 = vpack.c.bf16 %v537, %v537
    %v607 = vpack.c.bf16 %v539, %v539
    %v608 = vpack.c.bf16 %v542, %v542
    %v609 = vpack.c.bf16 %v544, %v544
    %610 = vst [vmem:[#allocation2] sm:$0xf] %v546
    %611 = vst [vmem:[#allocation2 + $0x4] sm:$0xf] %v547
    %612 = vst [vmem:[#allocation2 + $0x8] sm:$0xf] %v548
    %613 = vst [vmem:[#allocation2 + $0xc] sm:$0xf] %v549
    %614 = vst [vmem:[#allocation2 + $0x10] sm:$0xf] %v550
    %615 = vst [vmem:[#allocation2 + $0x14] sm:$0xf] %v551
    %616 = vst [vmem:[#allocation2 + $0x18] sm:$0xf] %v552
    %617 = vst [vmem:[#allocation2 + $0x1c] sm:$0xf] %v553
    %618 = vst [vmem:[#allocation2 + $0x20] sm:$0xf] %v554
    %619 = vst [vmem:[#allocation2 + $0x24] sm:$0xf] %v555
    %620 = vst [vmem:[#allocation2 + $0x28] sm:$0xf] %v556
    %621 = vst [vmem:[#allocation2 + $0x2c] sm:$0xf] %v557
    %622 = vst [vmem:[#allocation2 + $0x30] sm:$0xf] %v558
    %623 = vst [vmem:[#allocation2 + $0x34] sm:$0xf] %v559
    %624 = vst [vmem:[#allocation2 + $0x38] sm:$0xf] %v560
    %625 = vst [vmem:[#allocation2 + $0x3c] sm:$0xf] %v561
    %626 = vst [vmem:[#allocation2 + $0x40] sm:$0xf] %v562
    %627 = vst [vmem:[#allocation2 + $0x44] sm:$0xf] %v563
    %628 = vst [vmem:[#allocation2 + $0x48] sm:$0xf] %v564
    %629 = vst [vmem:[#allocation2 + $0x4c] sm:$0xf] %v565
    %630 = vst [vmem:[#allocation2 + $0x50] sm:$0xf] %v566
    %631 = vst [vmem:[#allocation2 + $0x54] sm:$0xf] %v567
    %632 = vst [vmem:[#allocation2 + $0x58] sm:$0xf] %v568
    %633 = vst [vmem:[#allocation2 + $0x5c] sm:$0xf] %v569
    %634 = vst [vmem:[#allocation2 + $0x60] sm:$0xf] %v570
    %635 = vst [vmem:[#allocation2 + $0x64] sm:$0xf] %v571
    %636 = vst [vmem:[#allocation2 + $0x68] sm:$0xf] %v572
    %637 = vst [vmem:[#allocation2 + $0x6c] sm:$0xf] %v573
    %638 = vst [vmem:[#allocation2 + $0x70] sm:$0xf] %v574
    %639 = vst [vmem:[#allocation2 + $0x74] sm:$0xf] %v575
    %640 = vst [vmem:[#allocation2 + $0x78] sm:$0xf] %v576
    %641 = vst [vmem:[#allocation2 + $0x7c] sm:$0xf] %v577
    %642 = vst [vmem:[#allocation2 + $0x80] sm:$0xf] %v578
    %643 = vst [vmem:[#allocation2 + $0x84] sm:$0xf] %v579
    %644 = vst [vmem:[#allocation2 + $0x88] sm:$0xf] %v580
    %645 = vst [vmem:[#allocation2 + $0x8c] sm:$0xf] %v581
    %646 = vst [vmem:[#allocation2 + $0x90] sm:$0xf] %v582
    %647 = vst [vmem:[#allocation2 + $0x94] sm:$0xf] %v583
    %648 = vst [vmem:[#allocation2 + $0x98] sm:$0xf] %v584
    %649 = vst [vmem:[#allocation2 + $0x9c] sm:$0xf] %v585
    %650 = vst [vmem:[#allocation2 + $0xa0] sm:$0xf] %v586
    %651 = vst [vmem:[#allocation2 + $0xa4] sm:$0xf] %v587
    %652 = vst [vmem:[#allocation2 + $0xa8] sm:$0xf] %v588
    %653 = vst [vmem:[#allocation2 + $0xac] sm:$0xf] %v589
    %654 = vst [vmem:[#allocation2 + $0xb0] sm:$0xf] %v590
    %655 = vst [vmem:[#allocation2 + $0xb4] sm:$0xf] %v591
    %656 = vst [vmem:[#allocation2 + $0xb8] sm:$0xf] %v592
    %657 = vst [vmem:[#allocation2 + $0xbc] sm:$0xf] %v593
    %658 = vst [vmem:[#allocation2 + $0xc0] sm:$0xf] %v594
    %659 = vst [vmem:[#allocation2 + $0xc4] sm:$0xf] %v595
    %660 = vst [vmem:[#allocation2 + $0xc8] sm:$0xf] %v596
    %661 = vst [vmem:[#allocation2 + $0xcc] sm:$0xf] %v597
    %662 = vst [vmem:[#allocation2 + $0xd0] sm:$0xf] %v598
    %663 = vst [vmem:[#allocation2 + $0xd4] sm:$0xf] %v599
    %664 = vst [vmem:[#allocation2 + $0xd8] sm:$0xf] %v600
    %665 = vst [vmem:[#allocation2 + $0xdc] sm:$0xf] %v601
    %666 = vst [vmem:[#allocation2 + $0xe0] sm:$0xf] %v602
    %667 = vst [vmem:[#allocation2 + $0xe4] sm:$0xf] %v603
    %668 = vst [vmem:[#allocation2 + $0xe8] sm:$0xf] %v604
    %669 = vst [vmem:[#allocation2 + $0xec] sm:$0xf] %v605
    %670 = vst [vmem:[#allocation2 + $0xf0] sm:$0xf] %v606
    %671 = vst [vmem:[#allocation2 + $0xf4] sm:$0xf] %v607
    %672 = vst [vmem:[#allocation2 + $0xf8] sm:$0xf] %v608
    %673 = vst [vmem:[#allocation2 + $0xfc] sm:$0xf] %v609
    %v674 = vadd.f32 %v387, %v389
    %v675 = vadd.f32 %v674, %v392
    %v676 = vadd.f32 %v675, %v394
    %v677 = vadd.f32 %v676, %v397
    %v678 = vadd.f32 %v677, %v399
    %v679 = vadd.f32 %v678, %v402
    %v680 = vadd.f32 %v679, %v404
    %v681 = vadd.f32 %v680, %v407
    %v682 = vadd.f32 %v681, %v409
    %v683 = vadd.f32 %v682, %v412
    %v684 = vadd.f32 %v683, %v414
    %v685 = vadd.f32 %v684, %v417
    %v686 = vadd.f32 %v685, %v419
    %v687 = vadd.f32 %v686, %v422
    %v688 = vadd.f32 %v687, %v424
    %v689 = vadd.f32 %v688, %v427
    %v690 = vadd.f32 %v689, %v429
    %v691 = vadd.f32 %v690, %v432
    %v692 = vadd.f32 %v691, %v434
    %v693 = vadd.f32 %v692, %v437
    %v694 = vadd.f32 %v693, %v439
    %v695 = vadd.f32 %v694, %v442
    %v696 = vadd.f32 %v695, %v444
    %v697 = vadd.f32 %v696, %v447
    %v698 = vadd.f32 %v697, %v449
    %v699 = vadd.f32 %v698, %v452
    %v700 = vadd.f32 %v699, %v454
    %v701 = vadd.f32 %v700, %v457
    %v702 = vadd.f32 %v701, %v459
    %v703 = vadd.f32 %v702, %v462
    %v704 = vadd.f32 %v703, %v464
    %v705 = vadd.f32 %v704, %v467
    %v706 = vadd.f32 %v705, %v469
    %v707 = vadd.f32 %v706, %v472
    %v708 = vadd.f32 %v707, %v474
    %v709 = vadd.f32 %v708, %v477
    %v710 = vadd.f32 %v709, %v479
    %v711 = vadd.f32 %v710, %v482
    %v712 = vadd.f32 %v711, %v484
    %v713 = vadd.f32 %v712, %v487
    %v714 = vadd.f32 %v713, %v489
    %v715 = vadd.f32 %v714, %v492
    %v716 = vadd.f32 %v715, %v494
    %v717 = vadd.f32 %v716, %v497
    %v718 = vadd.f32 %v717, %v499
    %v719 = vadd.f32 %v718, %v502
    %v720 = vadd.f32 %v719, %v504
    %v721 = vadd.f32 %v720, %v507
    %v722 = vadd.f32 %v721, %v509
    %v723 = vadd.f32 %v722, %v512
    %v724 = vadd.f32 %v723, %v514
    %v725 = vadd.f32 %v724, %v517
    %v726 = vadd.f32 %v725, %v519
    %v727 = vadd.f32 %v726, %v522
    %v728 = vadd.f32 %v727, %v524
    %v729 = vadd.f32 %v728, %v527
    %v730 = vadd.f32 %v729, %v529
    %v731 = vadd.f32 %v730, %v532
    %v732 = vadd.f32 %v731, %v534
    %v733 = vadd.f32 %v732, %v537
    %v734 = vadd.f32 %v733, %v539
    %v735 = vadd.f32 %v734, %v542
    %v736 = vadd.f32 %v735, %v544
    %v737 = vrot.slane %v736, 4
    %v738 = vadd.f32 %v736, %v737
    %v739 = vrot.slane %v738, 2
    %v740 = vadd.f32 %v738, %v739
    %v741 = vrot.slane %v740, 1
    %v742 = vadd.f32 %v740, %v741
    %743 = vst [vmem:[#allocation4] sm:$0x1] %v742
    %v744 = vmul.f32 %v387, %v387
    %v745 = vmul.f32 %v389, %v389
    %v746 = vmul.f32 %v392, %v392
    %v747 = vmul.f32 %v394, %v394
    %v748 = vmul.f32 %v397, %v397
    %v749 = vmul.f32 %v399, %v399
    %v750 = vmul.f32 %v402, %v402
    %v751 = vmul.f32 %v404, %v404
    %v752 = vmul.f32 %v407, %v407
    %v753 = vmul.f32 %v409, %v409
    %v754 = vmul.f32 %v412, %v412
    %v755 = vmul.f32 %v414, %v414
    %v756 = vmul.f32 %v417, %v417
    %v757 = vmul.f32 %v419, %v419
    %v758 = vmul.f32 %v422, %v422
    %v759 = vmul.f32 %v424, %v424
    %v760 = vmul.f32 %v427, %v427
    %v761 = vmul.f32 %v429, %v429
    %v762 = vmul.f32 %v432, %v432
    %v763 = vmul.f32 %v434, %v434
    %v764 = vmul.f32 %v437, %v437
    %v765 = vmul.f32 %v439, %v439
    %v766 = vmul.f32 %v442, %v442
    %v767 = vmul.f32 %v444, %v444
    %v768 = vmul.f32 %v447, %v447
    %v769 = vmul.f32 %v449, %v449
    %v770 = vmul.f32 %v452, %v452
    %v771 = vmul.f32 %v454, %v454
    %v772 = vmul.f32 %v457, %v457
    %v773 = vmul.f32 %v459, %v459
    %v774 = vmul.f32 %v462, %v462
    %v775 = vmul.f32 %v464, %v464
    %v776 = vmul.f32 %v467, %v467
    %v777 = vmul.f32 %v469, %v469
    %v778 = vmul.f32 %v472, %v472
    %v779 = vmul.f32 %v474, %v474
    %v780 = vmul.f32 %v477, %v477
    %v781 = vmul.f32 %v479, %v479
    %v782 = vmul.f32 %v482, %v482
    %v783 = vmul.f32 %v484, %v484
    %v784 = vmul.f32 %v487, %v487
    %v785 = vmul.f32 %v489, %v489
    %v786 = vmul.f32 %v492, %v492
    %v787 = vmul.f32 %v494, %v494
    %v788 = vmul.f32 %v497, %v497
    %v789 = vmul.f32 %v499, %v499
    %v790 = vmul.f32 %v502, %v502
    %v791 = vmul.f32 %v504, %v504
    %v792 = vmul.f32 %v507, %v507
    %v793 = vmul.f32 %v509, %v509
    %v794 = vmul.f32 %v512, %v512
    %v795 = vmul.f32 %v514, %v514
    %v796 = vmul.f32 %v517, %v517
    %v797 = vmul.f32 %v519, %v519
    %v798 = vmul.f32 %v522, %v522
    %v799 = vmul.f32 %v524, %v524
    %v800 = vmul.f32 %v527, %v527
    %v801 = vmul.f32 %v529, %v529
    %v802 = vmul.f32 %v532, %v532
    %v803 = vmul.f32 %v534, %v534
    %v804 = vmul.f32 %v537, %v537
    %v805 = vmul.f32 %v539, %v539
    %v806 = vmul.f32 %v542, %v542
    %v807 = vmul.f32 %v544, %v544
    %v808 = vadd.f32 %v744, %v745
    %v809 = vadd.f32 %v808, %v746
    %v810 = vadd.f32 %v809, %v747
    %v811 = vadd.f32 %v810, %v748
    %v812 = vadd.f32 %v811, %v749
    %v813 = vadd.f32 %v812, %v750
    %v814 = vadd.f32 %v813, %v751
    %v815 = vadd.f32 %v814, %v752
    %v816 = vadd.f32 %v815, %v753
    %v817 = vadd.f32 %v816, %v754
    %v818 = vadd.f32 %v817, %v755
    %v819 = vadd.f32 %v818, %v756
    %v820 = vadd.f32 %v819, %v757
    %v821 = vadd.f32 %v820, %v758
    %v822 = vadd.f32 %v821, %v759
    %v823 = vadd.f32 %v822, %v760
    %v824 = vadd.f32 %v823, %v761
    %v825 = vadd.f32 %v824, %v762
    %v826 = vadd.f32 %v825, %v763
    %v827 = vadd.f32 %v826, %v764
    %v828 = vadd.f32 %v827, %v765
    %v829 = vadd.f32 %v828, %v766
    %v830 = vadd.f32 %v829, %v767
    %v831 = vadd.f32 %v830, %v768
    %v832 = vadd.f32 %v831, %v769
    %v833 = vadd.f32 %v832, %v770
    %v834 = vadd.f32 %v833, %v771
    %v835 = vadd.f32 %v834, %v772
    %v836 = vadd.f32 %v835, %v773
    %v837 = vadd.f32 %v836, %v774
    %v838 = vadd.f32 %v837, %v775
    %v839 = vadd.f32 %v838, %v776
    %v840 = vadd.f32 %v839, %v777
    %v841 = vadd.f32 %v840, %v778
    %v842 = vadd.f32 %v841, %v779
    %v843 = vadd.f32 %v842, %v780
    %v844 = vadd.f32 %v843, %v781
    %v845 = vadd.f32 %v844, %v782
    %v846 = vadd.f32 %v845, %v783
    %v847 = vadd.f32 %v846, %v784
    %v848 = vadd.f32 %v847, %v785
    %v849 = vadd.f32 %v848, %v786
    %v850 = vadd.f32 %v849, %v787
    %v851 = vadd.f32 %v850, %v788
    %v852 = vadd.f32 %v851, %v789
    %v853 = vadd.f32 %v852, %v790
    %v854 = vadd.f32 %v853, %v791
    %v855 = vadd.f32 %v854, %v792
    %v856 = vadd.f32 %v855, %v793
    %v857 = vadd.f32 %v856, %v794
    %v858 = vadd.f32 %v857, %v795
    %v859 = vadd.f32 %v858, %v796
    %v860 = vadd.f32 %v859, %v797
    %v861 = vadd.f32 %v860, %v798
    %v862 = vadd.f32 %v861, %v799
    %v863 = vadd.f32 %v862, %v800
    %v864 = vadd.f32 %v863, %v801
    %v865 = vadd.f32 %v864, %v802
    %v866 = vadd.f32 %v865, %v803
    %v867 = vadd.f32 %v866, %v804
    %v868 = vadd.f32 %v867, %v805
    %v869 = vadd.f32 %v868, %v806
    %v870 = vadd.f32 %v869, %v807
    %v871 = vrot.slane %v870, 4
    %v872 = vadd.f32 %v870, %v871
    %v873 = vrot.slane %v872, 2
    %v874 = vadd.f32 %v872, %v873
    %v875 = vrot.slane %v874, 1
    %v876 = vadd.f32 %v874, %v875
    %877 = vst [vmem:[#allocation4 + $0x1] sm:$0x1] %v876
    // Predicated region
    $region10: #{tpu_custom_call.1} parent=1 // pred_check
      _
    $region11: #{tpu_custom_call.1} parent=1 // pred_check_branch
      %879 = sbr.rel (0) target = $region13
    $region12: #{tpu_custom_call.1} parent=1 // pred_region
      %881 = vsyncadd [#allocation3], 0
      %s882 = sshll.u32 [#allocation2], 4
      %s883 = int_to_ptr.vmem [resolvable:$true] %s882
      %s884 = sshll.u32 %s2, 4
      %s885 = int_to_ptr.hbm [resolvable:$true] %s884
      %890 = dma.vmem_to_hbm [thread:$0]  %s883, 4096, %s885, [#allocation3], 64, 64, 4
    $region13: #{tpu_custom_call.1} parent=1 // pred_fallthru
      _
    // Predicated region
    $region14: #{tpu_custom_call.1} parent=1 // pred_check
      _
    $region15: #{tpu_custom_call.1} parent=1 // pred_check_branch
      %892 = sbr.rel (0) target = $region17
    $region16: #{tpu_custom_call.1} parent=1 // pred_region
      %894 = vsyncadd [#allocation5], 0
      %s896 = sshll.u32 [#allocation4], 4
      %s897 = int_to_ptr.vmem [resolvable:$true] %s896
      %s898 = sshll.u32 %s3, 4
      %s899 = int_to_ptr.hbm [resolvable:$true] %s898
      %901 = dma.vmem_to_hbm [thread:$0]  %s897, 32, %s899, [#allocation5]
    $region17: #{tpu_custom_call.1} parent=1 // pred_fallthru
      _
    // Predicated region
    $region18: #{tpu_custom_call.1} parent=1 // pred_check
      _
    $region19: #{tpu_custom_call.1} parent=1 // pred_check_branch
      %903 = sbr.rel (0) target = $region21
    $region20: #{tpu_custom_call.1} parent=1 // pred_region
      %905 = dma.done [#allocation3], 4096
    $region21: #{tpu_custom_call.1} parent=1 // pred_fallthru
      _
    // Predicated region
    $region22: #{tpu_custom_call.1} parent=1 // pred_check
      _
    $region23: #{tpu_custom_call.1} parent=1 // pred_check_branch
      %907 = sbr.rel (0) target = $region25
    $region24: #{tpu_custom_call.1} parent=1 // pred_region
      %909 = dma.done [#allocation5], 32
    $region25: #{tpu_custom_call.1} parent=1 // pred_fallthru
      _
    %910 = vsyncpa [#allocation3], 1
    %911 = vsyncpa [#allocation5], 1

</llo_original>
